<compile_context>
chip_gen: v5e
topology: v5e:2x2
jax: 0.10.0
libtpu: 0.0.40
codegen_flags: <defaults>
</compile_context>

<pallas_src>
import functools

import jax
import jax.numpy as jnp
from jax.experimental import pallas as pl
from jax.experimental.pallas import tpu as pltpu

_LANE = 128
_SUBLANE = 8
_MAX_TILE_K = 2048                  # cap on the vocab (reduction) tile
_MAX_TILE_B = 1024                  # cap on the batch tile
_VMEM_TARGET = 36 * 1024 * 1024     # resident-bytes target used to bound tile_b


def _round_up(a, m):
    return (a + m - 1) // m * m


def _largest_dividing_tile(dim, max_tile, step):
    """Largest multiple of `step` that is <= max_tile and divides `dim` (or None)."""
    t = min(max_tile, dim)
    t -= t % step
    while t >= step:
        if dim % t == 0:
            return t
        t -= step
    return None


# ---------------------------------------------------------------------------
# Kernels
# ---------------------------------------------------------------------------
def _logreg_single_k_kernel(x_ref, w_ref, b_ref, o_ref):
    """Whole vocab in one K tile: straight-line logits + log-softmax."""
    logits = jnp.dot(x_ref[...], w_ref[...],
                     preferred_element_type=jnp.float32) + b_ref[...]
    m = jnp.max(logits, axis=-1, keepdims=True)
    shifted = logits - m
    lse = jnp.log(jnp.sum(jnp.exp(shifted), axis=-1, keepdims=True))
    o_ref[...] = shifted - lse


def _logreg_multi_k_kernel(x_ref, w_ref, b_ref, o_ref):
    """Vocab-tiled: accumulate logits directly in the resident output block."""
    k = pl.program_id(1)

    @pl.when(k == 0)
    def _init():
        o_ref[...] = jnp.zeros_like(o_ref)

    # MXU pass: [tile_b, tile_k] @ [tile_k, L] accumulated in f32 in the output
    # VMEM block (its block index is constant across k, so it stays resident).
    o_ref[...] += jnp.dot(x_ref[...], w_ref[...],
                          preferred_element_type=jnp.float32)

    @pl.when(k == pl.num_programs(1) - 1)
    def _finalize():
        logits = o_ref[...] + b_ref[...]
        m = jnp.max(logits, axis=-1, keepdims=True)
        shifted = logits - m
        lse = jnp.log(jnp.sum(jnp.exp(shifted), axis=-1, keepdims=True))
        o_ref[...] = shifted - lse


# ---------------------------------------------------------------------------
# Wrapper
# ---------------------------------------------------------------------------
@functools.partial(jax.jit, static_argnames=("tile_b", "tile_k"))
def logistic_sentiment_classifier_batched(x, w, b, *, tile_b=None, tile_k=None):
    """log_softmax(x @ w + b, axis=-1) via a Pallas TPU kernel."""
    B, V = x.shape
    Vw, L = w.shape
    assert V == Vw and b.shape == (L,)

    x32 = x.astype(jnp.float32)
    w32 = w.astype(jnp.float32)
    b32 = b.astype(jnp.float32).reshape(1, L)

    # ---- vocab (reduction) tile: never copy/pad x along V -------------------
    if tile_k is None:
        if V <= _MAX_TILE_K:
            tile_k = V                      # full-dim last axis is always legal
        else:
            # Largest 128-lane multiple that divides V; else stream whole rows.
            # TODO(synk): huge vocabs with no 128-multiple divisor fall back to
            # tile_k=V (whole w resident in VMEM); a masked-tail K-tiling path
            # would be needed if that ever exceeds VMEM.
            tile_k = _largest_dividing_tile(V, _MAX_TILE_K, _LANE) or V
    assert tile_k == V or (V % tile_k == 0 and tile_k % _LANE == 0), \
        "tile_k must equal V or be a 128-multiple divisor of V"
    num_k = V // tile_k

    # ---- batch tile ----------------------------------------------------------
    w_resident = 2 * tile_k * _LANE * 4          # w is lane-padded inside VMEM
    row_bytes = 2 * tile_k * 4 + 2 * _LANE * 4   # x (double-buffered) + out row
    if tile_b is None:
        rows_budget = max(_SUBLANE, (_VMEM_TARGET - w_resident) // row_bytes)
        max_tb = min(_MAX_TILE_B,
                     max(_SUBLANE, rows_budget - rows_budget % _SUBLANE))
        if B <= max_tb:
            tile_b = B                           # one full-dim batch tile
        else:
            # Prefer a dividing tile (no padding); else pad batch rows only.
            tile_b = _largest_dividing_tile(B, max_tb, _SUBLANE) or max_tb
    assert tile_b == B or tile_b % _SUBLANE == 0, \
        "tile_b must equal B or be a multiple of 8"

    pad_b = (_round_up(B, tile_b) - B) if (B % tile_b) else 0
    if pad_b:
        # Rare fallback: pad rows only (zero rows -> finite log-probs, sliced off).
        x32 = jnp.pad(x32, ((0, pad_b), (0, 0)))
    B_pad = B + pad_b
    num_b = B_pad // tile_b

    # ---- VMEM limit from the actual footprint (+50% headroom, 32 MiB floor) --
    footprint = (2 * tile_b * tile_k * 4          # x, double-buffered
                 + w_resident                     # w
                 + 2 * tile_b * _LANE * 4         # out (lane-padded in VMEM)
                 + 2 * _SUBLANE * _LANE * 4)      # bias
    vmem_limit = max(32 * 1024 * 1024, int(footprint * 1.5))

    out_shape = jax.ShapeDtypeStruct((B_pad, L), jnp.float32)

    if num_k == 1:
        out = pl.pallas_call(
            _logreg_single_k_kernel,
            out_shape=out_shape,
            grid_spec=pltpu.PrefetchScalarGridSpec(
                num_scalar_prefetch=0,
                grid=(num_b,),
                in_specs=[
                    pl.BlockSpec((tile_b, tile_k), lambda i: (i, 0)),  # x
                    pl.BlockSpec((tile_k, L), lambda i: (0, 0)),       # w (once)
                    pl.BlockSpec((1, L), lambda i: (0, 0)),            # bias
                ],
                out_specs=pl.BlockSpec((tile_b, L), lambda i: (i, 0)),
            ),
            compiler_params=pltpu.CompilerParams(
                dimension_semantics=("parallel",),
                vmem_limit_bytes=vmem_limit,
            ),
        )(x32, w32, b32)
    else:
        out = pl.pallas_call(
            _logreg_multi_k_kernel,
            out_shape=out_shape,
            grid_spec=pltpu.PrefetchScalarGridSpec(
                num_scalar_prefetch=0,
                grid=(num_b, num_k),                 # reduction (K) axis last
                in_specs=[
                    pl.BlockSpec((tile_b, tile_k), lambda i, k: (i, k)),  # x
                    pl.BlockSpec((tile_k, L), lambda i, k: (k, 0)),       # w
                    pl.BlockSpec((1, L), lambda i, k: (0, 0)),            # bias
                ],
                out_specs=pl.BlockSpec((tile_b, L), lambda i, k: (i, 0)),
            ),
            compiler_params=pltpu.CompilerParams(
                dimension_semantics=("parallel", "arbitrary"),
                vmem_limit_bytes=vmem_limit,
            ),
        )(x32, w32, b32)

    return out[:B] if pad_b else out


if __name__ == "__main__":
    # Small shapes consistent with the module: vocab=384, labels=5, batch=12.
    VOCAB, LABELS, BATCH = 384, 5, 12

    key = jax.random.PRNGKey(0)
    kx, kw, kb = jax.random.split(key, 3)

    # Mirror nn.init.uniform_(w, -1/sqrt(V), 1/sqrt(V)); b is torch.empty in the
    # reference (uninitialized), so use the same deterministic uniform range.
    bound = 1.0 / jnp.sqrt(jnp.float32(VOCAB))
    w = jax.random.uniform(kw, (VOCAB, LABELS), jnp.float32, -bound, bound)
    b = jax.random.uniform(kb, (LABELS,), jnp.float32, -bound, bound)
    x = jax.random.normal(kx, (BATCH, VOCAB), jnp.float32)

    ref = jax.nn.log_softmax(x @ w + b, axis=-1)

    # 1) Default auto-tiling: single K tile (tile_k = V), single batch tile.
    out = jax.block_until_ready(logistic_sentiment_classifier_batched(x, w, b))
    assert out.shape == (BATCH, LABELS)
    assert jnp.allclose(out, ref, atol=1e-5, rtol=1e-5)

    # 2) Vocab-tiled accumulation path (V=384 / tile_k=128 -> 3 K steps).
    out2 = jax.block_until_ready(
        logistic_sentiment_classifier_batched(x, w, b, tile_k=128))
    assert jnp.allclose(out2, ref, atol=1e-5, rtol=1e-5)

    # 3) Multi-batch-tile path with the rows-only padding fallback
    #    (B=12, tile_b=8 -> padded to 16, 2 batch tiles, pad rows sliced off).
    out3 = jax.block_until_ready(
        logistic_sentiment_classifier_batched(x, w, b, tile_b=8, tile_k=128))
    assert jnp.allclose(out3, ref, atol=1e-5, rtol=1e-5)

    print("KERNEL_OK")
</pallas_src>

<mosaic_0001>
module attributes {stable_mosaic.version = 11 : i64} {
  func.func @_logreg_single_k_kernel(%arg0: i32, %arg1: memref<12x384xf32, #tpu.memory_space<vmem>>, %arg2: memref<384x5xf32, #tpu.memory_space<vmem>>, %arg3: memref<1x5xf32, #tpu.memory_space<vmem>>, %arg4: memref<12x5xf32, #tpu.memory_space<vmem>>) attributes {dimension_semantics = [#tpu.dimension_semantics<parallel>], iteration_bounds = array<i64: 1>, scalar_prefetch = 0 : i64, scratch_operands = 0 : i64, tpu.core_type = #tpu.core_type<tc>, window_params = [{transform_indices = @transform_0, window_bounds = array<i64: 12, 384>}, {pipeline_mode = #tpu.pipeline_mode<synchronous>, transform_indices = @transform_1, window_bounds = array<i64: 384, 5>}, {pipeline_mode = #tpu.pipeline_mode<synchronous>, transform_indices = @transform_2, window_bounds = array<i64: 1, 5>}, {transform_indices = @transform_3, window_bounds = array<i64: 12, 5>}]} {
    %c0 = arith.constant 0 : index
    %c0_0 = arith.constant 0 : index
    %0 = vector.load %arg1[%c0, %c0_0] : memref<12x384xf32, #tpu.memory_space<vmem>>, vector<12x384xf32>
    %c0_1 = arith.constant 0 : index
    %c0_2 = arith.constant 0 : index
    %1 = vector.load %arg2[%c0_1, %c0_2] : memref<384x5xf32, #tpu.memory_space<vmem>>, vector<384x5xf32>
    %cst = arith.constant dense<0.000000e+00> : vector<12x5xf32>
    %2 = tpu.matmul %0, %1, %cst {dimension_numbers = #tpu.dot_dimension_numbers<[1], [0], [0], [1], [0, 0, 1, 1], [], []>} : vector<12x384xf32>, vector<384x5xf32>, vector<12x5xf32> -> vector<12x5xf32>
    %c0_3 = arith.constant 0 : index
    %c0_4 = arith.constant 0 : index
    %3 = vector.load %arg3[%c0_3, %c0_4] : memref<1x5xf32, #tpu.memory_space<vmem>>, vector<1x5xf32>
    %4 = vector.broadcast %3 : vector<1x5xf32> to vector<12x5xf32>
    %5 = arith.addf %2, %4 : vector<12x5xf32>
    %cst_5 = arith.constant dense<0xFF800000> : vector<12xf32>
    %6 = vector.multi_reduction <maximumf>, %5, %cst_5 [1] : vector<12x5xf32> to vector<12xf32>
    %7 = vector.shape_cast %6 : vector<12xf32> to vector<12x1xf32>
    %8 = vector.broadcast %7 : vector<12x1xf32> to vector<12x5xf32>
    %9 = arith.subf %5, %8 : vector<12x5xf32>
    %10 = math.exp %9 : vector<12x5xf32>
    %cst_6 = arith.constant dense<0.000000e+00> : vector<12xf32>
    %11 = vector.multi_reduction <add>, %10, %cst_6 [1] : vector<12x5xf32> to vector<12xf32>
    %12 = vector.shape_cast %11 : vector<12xf32> to vector<12x1xf32>
    %13 = math.log %12 : vector<12x1xf32>
    %14 = vector.broadcast %13 : vector<12x1xf32> to vector<12x5xf32>
    %15 = arith.subf %9, %14 : vector<12x5xf32>
    %c0_7 = arith.constant 0 : index
    %c0_8 = arith.constant 0 : index
    %16 = vector.load %arg4[%c0_7, %c0_8] : memref<12x5xf32, #tpu.memory_space<vmem>>, vector<12x5xf32>
    tpu.vector_store %arg4[%c0_7, %c0_8], %15 {strides = array<i32>} : memref<12x5xf32, #tpu.memory_space<vmem>>, vector<12x5xf32>,
    return
  }
  func.func @transform_0(%arg0: i32) -> (i32, i32) {
    %c0_i32 = arith.constant 0 : i32
    %c0_i32_0 = arith.constant 0 : i32
    return %arg0, %c0_i32 : i32, i32
  }
  func.func @transform_1(%arg0: i32) -> (i32, i32) {
    %c0_i32 = arith.constant 0 : i32
    %c0_i32_0 = arith.constant 0 : i32
    %c0_i32_1 = arith.constant 0 : i32
    return %c0_i32, %c0_i32_0 : i32, i32
  }
  func.func @transform_2(%arg0: i32) -> (i32, i32) {
    %c0_i32 = arith.constant 0 : i32
    %c0_i32_0 = arith.constant 0 : i32
    %c0_i32_1 = arith.constant 0 : i32
    return %c0_i32, %c0_i32_0 : i32, i32
  }
  func.func @transform_3(%arg0: i32) -> (i32, i32) {
    %c0_i32 = arith.constant 0 : i32
    %c0_i32_0 = arith.constant 0 : i32
    return %arg0, %c0_i32 : i32, i32
  }
}

</mosaic_0001>

<llo_original>
// kernel: logistic_sentiment_classifier_batched.1
$region0: #{logistic_sentiment_classifier_batched.1}
  #allocation0 [shape = 'u32[]', space=smem, size = 0x4, offset = 0x4, fixed_abs, tag = 'smem constant byte address 0x4 - core index']
  #allocation1 [shape = 'u32[72,128]{1,0:T(1,128)}', space=vmem, size = 0x9000, scoped, tag = 'internal scratch']
  %s0 = inlined_call_operand.vmem [shape: f32[12,384], index: 0, kind: input, shape index: {}]
  %s1 = inlined_call_operand.vmem [shape: f32[384,5], index: 1, kind: input, shape index: {}]
  %s2 = inlined_call_operand.vmem [shape: f32[1,5], index: 2, kind: input, shape index: {}]
  %s3 = inlined_call_operand.vmem [shape: f32[12,5], index: 3, kind: output, shape index: {}]
  %s4 = sld [smem:[#allocation0]]
  $region22: #{logistic_sentiment_classifier_batched.1} parent=0
    _
  %s6 = ssub.s32 1, %s4
  %s7 = scalar_select 0, %s6, %s4
  // Predicated region
  $region2: #{logistic_sentiment_classifier_batched.1} parent=0 // pred_check
    _
  $region3: #{logistic_sentiment_classifier_batched.1} parent=0 // pred_check_branch
    %9 = sbr.rel (0) target = $region5
  $region4: #{logistic_sentiment_classifier_batched.1} parent=0 // pred_region
    _
  $region5: #{logistic_sentiment_classifier_batched.1} parent=0 // pred_fallthru
    _
  // Predicated region
  $region6: #{logistic_sentiment_classifier_batched.1} parent=0 // pred_check
    _
  $region7: #{logistic_sentiment_classifier_batched.1} parent=0 // pred_check_branch
    %11 = sbr.rel (0) target = $region9
  $region8: #{logistic_sentiment_classifier_batched.1} parent=0 // pred_region
    _
  $region9: #{logistic_sentiment_classifier_batched.1} parent=0 // pred_fallthru
    _
  // Predicated region
  $region10: #{logistic_sentiment_classifier_batched.1} parent=0 // pred_check
    _
  $region11: #{logistic_sentiment_classifier_batched.1} parent=0 // pred_check_branch
    %13 = sbr.rel (0) target = $region13
  $region12: #{logistic_sentiment_classifier_batched.1} parent=0 // pred_region
    _
  $region13: #{logistic_sentiment_classifier_batched.1} parent=0 // pred_fallthru
    _
  %v14 = vld [vmem:[%s0] sm:$0xff]
  %v15 = vld [vmem:[%s0 + $0x8] sm:$0xff]
  %v16 = vld [vmem:[%s0 + $0x10] sm:$0xff]
  %v17 = vld [vmem:[%s0 + $0x18] sm:$0xf]
  %v18 = vld [vmem:[%s0 + $0x20] sm:$0xf]
  %v19 = vld [vmem:[%s0 + $0x28] sm:$0xf]
  %v20 = vld [vmem:[%s1] sm:$0xff]
  %v21 = vld [vmem:[%s1 + $0x8] sm:$0xff]
  %v22 = vld [vmem:[%s1 + $0x10] sm:$0xff]
  %v23 = vld [vmem:[%s1 + $0x18] sm:$0xff]
  %v24 = vld [vmem:[%s1 + $0x20] sm:$0xff]
  %v25 = vld [vmem:[%s1 + $0x28] sm:$0xff]
  %v26 = vld [vmem:[%s1 + $0x30] sm:$0xff]
  %v27 = vld [vmem:[%s1 + $0x38] sm:$0xff]
  %v28 = vld [vmem:[%s1 + $0x40] sm:$0xff]
  %v29 = vld [vmem:[%s1 + $0x48] sm:$0xff]
  %v30 = vld [vmem:[%s1 + $0x50] sm:$0xff]
  %v31 = vld [vmem:[%s1 + $0x58] sm:$0xff]
  %v32 = vld [vmem:[%s1 + $0x60] sm:$0xff]
  %v33 = vld [vmem:[%s1 + $0x68] sm:$0xff]
  %v34 = vld [vmem:[%s1 + $0x70] sm:$0xff]
  %v35 = vld [vmem:[%s1 + $0x78] sm:$0xff]
  %v36 = vld [vmem:[%s1 + $0x80] sm:$0xff]
  %v37 = vld [vmem:[%s1 + $0x88] sm:$0xff]
  %v38 = vld [vmem:[%s1 + $0x90] sm:$0xff]
  %v39 = vld [vmem:[%s1 + $0x98] sm:$0xff]
  %v40 = vld [vmem:[%s1 + $0xa0] sm:$0xff]
  %v41 = vld [vmem:[%s1 + $0xa8] sm:$0xff]
  %v42 = vld [vmem:[%s1 + $0xb0] sm:$0xff]
  %v43 = vld [vmem:[%s1 + $0xb8] sm:$0xff]
  %v44 = vld [vmem:[%s1 + $0xc0] sm:$0xff]
  %v45 = vld [vmem:[%s1 + $0xc8] sm:$0xff]
  %v46 = vld [vmem:[%s1 + $0xd0] sm:$0xff]
  %v47 = vld [vmem:[%s1 + $0xd8] sm:$0xff]
  %v48 = vld [vmem:[%s1 + $0xe0] sm:$0xff]
  %v49 = vld [vmem:[%s1 + $0xe8] sm:$0xff]
  %v50 = vld [vmem:[%s1 + $0xf0] sm:$0xff]
  %v51 = vld [vmem:[%s1 + $0xf8] sm:$0xff]
  %v52 = vld [vmem:[%s1 + $0x100] sm:$0xff]
  %v53 = vld [vmem:[%s1 + $0x108] sm:$0xff]
  %v54 = vld [vmem:[%s1 + $0x110] sm:$0xff]
  %v55 = vld [vmem:[%s1 + $0x118] sm:$0xff]
  %v56 = vld [vmem:[%s1 + $0x120] sm:$0xff]
  %v57 = vld [vmem:[%s1 + $0x128] sm:$0xff]
  %v58 = vld [vmem:[%s1 + $0x130] sm:$0xff]
  %v59 = vld [vmem:[%s1 + $0x138] sm:$0xff]
  %v60 = vld [vmem:[%s1 + $0x140] sm:$0xff]
  %v61 = vld [vmem:[%s1 + $0x148] sm:$0xff]
  %v62 = vld [vmem:[%s1 + $0x150] sm:$0xff]
  %v63 = vld [vmem:[%s1 + $0x158] sm:$0xff]
  %v64 = vld [vmem:[%s1 + $0x160] sm:$0xff]
  %v65 = vld [vmem:[%s1 + $0x168] sm:$0xff]
  %v66 = vld [vmem:[%s1 + $0x170] sm:$0xff]
  %v67 = vld [vmem:[%s1 + $0x178] sm:$0xff]
  %v68 = vld [vmem:[%s2] sm:$0x1]
  %v70 = vperm.slane %v68, 0
  %72 = vmatpush.msra.mxu0 %v35
  %73 = vmatpush.msra.mxu0 %v34
  %74 = vmatpush.msra.mxu0 %v33
  %75 = vmatpush.msra.mxu0 %v32
  %76 = vmatpush.msra.mxu0 %v31
  %77 = vmatpush.msra.mxu0 %v30
  %78 = vmatpush.msra.mxu0 %v29
  %79 = vmatpush.msra.mxu0 %v28
  %80 = vmatpush.msra.mxu0 %v27
  %81 = vmatpush.msra.mxu0 %v26
  %82 = vmatpush.msra.mxu0 %v25
  %83 = vmatpush.msra.mxu0 %v24
  %84 = vmatpush.msra.mxu0 %v23
  %85 = vmatpush.msra.mxu0 %v22
  %86 = vmatpush.msra.mxu0 %v21
  %87 = vmatpush.msra.mxu0 %v20
  %88 = vmatmul.f32.gmra.mxu0 %v14
  %v89 = vpop.f32.mrf.mxu0
  %v90 = vadd.f32 %v70, %v89
  %91 = vmatmul.f32.gmra.mxu0 %v17
  %v92 = vpop.f32.mrf.mxu0
  %v93 = vadd.f32 %v70, %v92
  %94 = vdwg.mxu0
  %95 = vmatpush.msra.mxu0 %v51
  %96 = vmatpush.msra.mxu0 %v50
  %97 = vmatpush.msra.mxu0 %v49
  %98 = vmatpush.msra.mxu0 %v48
  %99 = vmatpush.msra.mxu0 %v47
  %100 = vmatpush.msra.mxu0 %v46
  %101 = vmatpush.msra.mxu0 %v45
  %102 = vmatpush.msra.mxu0 %v44
  %103 = vmatpush.msra.mxu0 %v43
  %104 = vmatpush.msra.mxu0 %v42
  %105 = vmatpush.msra.mxu0 %v41
  %106 = vmatpush.msra.mxu0 %v40
  %107 = vmatpush.msra.mxu0 %v39
  %108 = vmatpush.msra.mxu0 %v38
  %109 = vmatpush.msra.mxu0 %v37
  %110 = vmatpush.msra.mxu0 %v36
  %111 = vmatmul.f32.gmra.mxu0 %v15
  %v112 = vpop.f32.mrf.mxu0
  %v113 = vadd.f32 %v90, %v112
  %114 = vmatmul.f32.gmra.mxu0 %v18
  %v115 = vpop.f32.mrf.mxu0
  %v116 = vadd.f32 %v93, %v115
  %117 = vdwg.mxu0
  %118 = vmatpush.msra.mxu0 %v67
  %119 = vmatpush.msra.mxu0 %v66
  %120 = vmatpush.msra.mxu0 %v65
  %121 = vmatpush.msra.mxu0 %v64
  %122 = vmatpush.msra.mxu0 %v63
  %123 = vmatpush.msra.mxu0 %v62
  %124 = vmatpush.msra.mxu0 %v61
  %125 = vmatpush.msra.mxu0 %v60
  %126 = vmatpush.msra.mxu0 %v59
  %127 = vmatpush.msra.mxu0 %v58
  %128 = vmatpush.msra.mxu0 %v57
  %129 = vmatpush.msra.mxu0 %v56
  %130 = vmatpush.msra.mxu0 %v55
  %131 = vmatpush.msra.mxu0 %v54
  %132 = vmatpush.msra.mxu0 %v53
  %133 = vmatpush.msra.mxu0 %v52
  %134 = vmatmul.f32.gmra.mxu0 %v16
  %v135 = vpop.f32.mrf.mxu0
  %v136 = vadd.f32 %v113, %v135
  %137 = vmatmul.f32.gmra.mxu0 %v19
  %v138 = vpop.f32.mrf.mxu0
  %v139 = vadd.f32 %v116, %v138
  %140 = vdwg.mxu0
  %vm141 = vcmask 39936
  %v142 = vsel %vm141, %v136, -inf
  %143 = vmax.xlane.f32.xlu0 %v142
  %v144 = vpop.xlane.xlu0 %143
  %vm145 = vcmask 35840
  %v146 = vsel %vm145, %v139, -inf
  %147 = vmax.xlane.f32.xlu0 %v146
  %v148 = vpop.xlane.xlu0 %147
  %v149 = vsub.f32 %v136, %v144
  %v150 = vsub.f32 %v139, %v148
  %v151 = vmul.f32 %v149, 1.442695
  %v152 = vpow.pop %v151
  %v153 = vmul.f32 %v150, 1.442695
  %v154 = vpow.pop %v153
  %v155 = vsel %vm141, %v152, 0.0
  %156 = vadd.xlane.f32.xlu0 %v155
  %v157 = vpop.xlane.xlu0 %156
  %v158 = vsel %vm145, %v154, 0.0
  %159 = vadd.xlane.f32.xlu0 %v158
  %v160 = vpop.xlane.xlu0 %159
  %v161 = vlog2.pop %v157
  %v162 = vmul.f32 %v161, 0.6931472
  %v163 = vlog2.pop %v160
  %v164 = vmul.f32 %v163, 0.6931472
  %v165 = vsub.f32 %v149, %v162
  %v166 = vsub.f32 %v150, %v164
  %167 = vst.msk [vmem:[%s3] sm:$0xff] %vm141, %v165
  %168 = vst.msk [vmem:[%s3 + $0x8] sm:$0xf] %vm145, %v166
  // Predicated region
  $region14: #{logistic_sentiment_classifier_batched.1} parent=0 // pred_check
    _
  $region15: #{logistic_sentiment_classifier_batched.1} parent=0 // pred_check_branch
    %170 = sbr.rel (0) target = $region17
  $region16: #{logistic_sentiment_classifier_batched.1} parent=0 // pred_region
    _
  $region17: #{logistic_sentiment_classifier_batched.1} parent=0 // pred_fallthru
    _
  // Predicated region
  $region18: #{logistic_sentiment_classifier_batched.1} parent=0 // pred_check
    _
  $region19: #{logistic_sentiment_classifier_batched.1} parent=0 // pred_check_branch
    %172 = sbr.rel (0) target = $region21
  $region20: #{logistic_sentiment_classifier_batched.1} parent=0 // pred_region
    _
  $region21: #{logistic_sentiment_classifier_batched.1} parent=0 // pred_fallthru
    _

</llo_original>
